<compile_context>
chip_gen: v7x
topology: tpu7x:2x2x1
jax: 0.10.0
libtpu: 0.0.40
codegen_flags: <defaults>
</compile_context>

<pallas_src>
import functools
import math

import jax
import jax.numpy as jnp
from jax.experimental import pallas as pl
from jax.experimental.pallas import tpu as pltpu


def _round_up(n, m):
    return ((n + m - 1) // m) * m


def conv_block_kernel(x_ref, w_ref, p_ref, out_ref, *,
                      block_b, L, K, C_in, C_out, C_out_pad, output_size,
                      apply_layernorm, eps, pool_divisible):
    """One grid step processes `block_b` batch elements.

    x_ref  : (block_b, L + K - 1, C_in)        'same'-padded input window (bf16/f32)
    w_ref  : (K, C_in, C_out_pad)              conv taps, C_out zero-padded to 128 lanes
    p_ref  : (3, C_out_pad)  f32               rows: conv bias, LN gamma, LN beta
    out_ref: (block_b, output_size, C_out_pad) f32
    """
    Bt = block_b
    rows = Bt * L

    x = x_ref[...]

    # ---- Conv1d ('same') == K accumulating MXU matmuls on shifted windows. ----
    # The (Bt, L, C_in) -> (Bt*L, C_in) collapse is a free retiling when L % 8 == 0;
    # otherwise Mosaic inserts a VMEM-local relayout copy (cheap vs. the HBM saved).
    # The ragged contraction (C_in < 128) is masked by Mosaic when feeding the MXU.
    acc = jnp.dot(x[:, 0:L, :].reshape(rows, C_in), w_ref[0],
                  preferred_element_type=jnp.float32)
    for k in range(1, K):
        acc = acc + jnp.dot(x[:, k:k + L, :].reshape(rows, C_in), w_ref[k],
                            preferred_element_type=jnp.float32)
    acc = acc + p_ref[0:1, :]                      # conv bias (padded lanes stay 0)

    # ---- LayerNorm over the real C_out channels: single fused pass. ----
    if apply_layernorm:
        inv_c = jnp.float32(1.0 / C_out)
        mean = jnp.sum(acc, axis=-1, keepdims=True) * inv_c       # padded lanes add 0
        mean_sq = jnp.sum(acc * acc, axis=-1, keepdims=True) * inv_c
        var = mean_sq - mean * mean
        acc = (acc - mean) * jax.lax.rsqrt(var + eps)
        acc = acc * p_ref[1:2, :] + p_ref[2:3, :]  # gamma/beta zero-padded -> padded lanes -> 0

    # ---- ReLU ----
    acc = jnp.maximum(acc, 0.0)

    # ---- AdaptiveMaxPool1d(output_size) over the L axis ----
    acc3 = acc.reshape(Bt, L, C_out_pad)
    if pool_divisible:
        seg = L // output_size
        pooled = jnp.max(acc3.reshape(Bt, output_size, seg, C_out_pad), axis=2)
    else:
        # Exact PyTorch AdaptiveMaxPool1d windows (may overlap when L % output_size != 0).
        pieces = []
        for i in range(output_size):
            s = (i * L) // output_size
            e = -(-((i + 1) * L) // output_size)
            pieces.append(jnp.max(acc3[:, s:e, :], axis=1, keepdims=True))
        pooled = jnp.concatenate(pieces, axis=1)

    out_ref[...] = pooled.astype(out_ref.dtype)


def conv_block_forward(x, w, b, gamma, beta, *, kernel_size, output_size,
                       apply_layernorm=True, eps=1e-5, block_b=None,
                       use_bf16=True, vmem_budget_bytes=12 * 1024 * 1024):
    """x: (B, L, C_in); w: (K, C_in, C_out) tap-major; b/gamma/beta: (C_out,).

    Returns (B, output_size, C_out) f32, matching PyTorch ConvBlock.forward.
    """
    B, L, C_in = x.shape
    K = kernel_size
    C_out = w.shape[-1]
    assert w.shape == (K, C_in, C_out)

    C_out_pad = _round_up(C_out, 128)          # lane-dense weights / LN / output stores
    Lp = L + K - 1
    # PyTorch padding='same' asymmetry: left = (K-1)//2, right = K-1-left.
    pad_l = (K - 1) // 2
    pad_r = (K - 1) - pad_l

    mm_dtype = jnp.bfloat16 if use_bf16 else jnp.float32
    itemsize = jnp.dtype(mm_dtype).itemsize

    # ---- Block-size heuristic: multi-MiB blocks, sized against a VMEM budget. ----
    if block_b is None:
        per_b = (2 * Lp * C_in * itemsize              # double-buffered input block
                 + 2 * output_size * C_out_pad * 4     # double-buffered output block
                 + 3 * L * C_out_pad * 4)              # f32 intermediates (acc / pool temps)
        block_b = max(1, min(B, vmem_budget_bytes // max(per_b, 1)))
    if B >= 2:
        # Keep >= 2 grid steps so the 'parallel' axis can shard across v7x's 2 TCs.
        block_b = min(block_b, -(-B // 2))
    block_b = max(1, min(block_b, B))

    B_pad = _round_up(B, block_b)
    num_steps = B_pad // block_b

    # 'same' L-padding + batch padding, applied once to the small raw input in the
    # matmul dtype.  No im2col slab, no 128-lane contraction padding in HBM.
    x_p = jnp.pad(x.astype(mm_dtype), ((0, B_pad - B), (pad_l, pad_r), (0, 0)))

    w2 = jnp.pad(w, ((0, 0), (0, 0), (0, C_out_pad - C_out))).astype(mm_dtype)
    params = jnp.stack([
        jnp.pad(b.astype(jnp.float32), (0, C_out_pad - C_out)),
        jnp.pad(gamma.astype(jnp.float32), (0, C_out_pad - C_out)),
        jnp.pad(beta.astype(jnp.float32), (0, C_out_pad - C_out)),
    ], axis=0)                                         # (3, C_out_pad): bias, gamma, beta

    pool_divisible = (L % output_size == 0)

    kernel = functools.partial(
        conv_block_kernel, block_b=block_b, L=L, K=K, C_in=C_in, C_out=C_out,
        C_out_pad=C_out_pad, output_size=output_size,
        apply_layernorm=apply_layernorm, eps=eps, pool_divisible=pool_divisible)

    bytes_accessed = int(x_p.size * itemsize + w2.size * itemsize
                         + params.size * 4
                         + B_pad * output_size * C_out_pad * 4)
    cost = pl.CostEstimate(flops=2 * B * L * K * C_in * C_out,
                           transcendentals=0,
                           bytes_accessed=bytes_accessed)

    out = pl.pallas_call(
        kernel,
        out_shape=jax.ShapeDtypeStruct((B_pad, output_size, C_out_pad), jnp.float32),
        grid_spec=pltpu.PrefetchScalarGridSpec(
            num_scalar_prefetch=0,
            grid=(num_steps,),
            in_specs=[
                pl.BlockSpec((block_b, Lp, C_in), lambda i: (i, 0, 0)),
                pl.BlockSpec((K, C_in, C_out_pad), lambda i: (0, 0, 0)),
                pl.BlockSpec((3, C_out_pad), lambda i: (0, 0)),
            ],
            out_specs=pl.BlockSpec((block_b, output_size, C_out_pad),
                                   lambda i: (i, 0, 0)),
        ),
        compiler_params=pltpu.CompilerParams(
            dimension_semantics=("parallel",),
            vmem_limit_bytes=32 * 1024 * 1024),
        cost_estimate=cost,
    )(x_p, w2, params)

    # Strip batch padding and channel padding (padded lanes are identically 0).
    return out[:B, :, :C_out]


def ref_forward(x, w, b, gamma, beta, *, kernel_size, output_size,
                apply_layernorm=True, eps=1e-5):
    """Pure-JAX reference mirroring the PyTorch forward (for sanity check)."""
    B, L, C_in = x.shape
    K = kernel_size
    pad_l = (K - 1) // 2
    pad_r = (K - 1) - pad_l
    xt = jnp.transpose(x, (0, 2, 1))                        # (B, C_in, L)
    w_oik = jnp.transpose(w, (2, 1, 0))                     # (C_out, C_in, K)
    y = jax.lax.conv_general_dilated(
        xt, w_oik, window_strides=(1,), padding=[(pad_l, pad_r)],
        dimension_numbers=("NCH", "OIH", "NCH"))
    y = y + b[None, :, None]
    if apply_layernorm:
        yt = jnp.transpose(y, (0, 2, 1))
        mean = yt.mean(-1, keepdims=True)
        var = ((yt - mean) ** 2).mean(-1, keepdims=True)
        yt = (yt - mean) / jnp.sqrt(var + eps) * gamma + beta
        y = jnp.transpose(yt, (0, 2, 1))
    y = jnp.maximum(y, 0.0)
    pools = []
    for i in range(output_size):
        s = (i * L) // output_size
        e = -(-((i + 1) * L) // output_size)
        pools.append(y[:, :, s:e].max(-1))
    y = jnp.stack(pools, axis=-1)                           # (B, C_out, output_size)
    return jnp.transpose(y, (0, 2, 1))                      # (B, output_size, C_out)


if __name__ == "__main__":
    # Small deterministic config consistent with the module.
    B, L = 2, 16
    in_channels, out_channels = 4, 8
    kernel_size, output_size = 3, 4

    key = jax.random.PRNGKey(0)
    kx, kw, kb = jax.random.split(key, 3)

    x = jax.random.normal(kx, (B, L, in_channels), dtype=jnp.float32)

    # Deterministic parameter init (PyTorch-style uniform bound), tap-major weight.
    fan_in = in_channels * kernel_size
    bound = 1.0 / math.sqrt(fan_in)
    w = jax.random.uniform(kw, (kernel_size, in_channels, out_channels),
                           minval=-bound, maxval=bound, dtype=jnp.float32)
    b = jax.random.uniform(kb, (out_channels,), minval=-bound, maxval=bound,
                           dtype=jnp.float32)
    gamma = jnp.ones((out_channels,), dtype=jnp.float32)
    beta = jnp.zeros((out_channels,), dtype=jnp.float32)

    ref = ref_forward(x, w, b, gamma, beta,
                      kernel_size=kernel_size, output_size=output_size,
                      apply_layernorm=True)

    # f32 operands with LayerNorm — strict check.
    out = conv_block_forward(x, w, b, gamma, beta,
                             kernel_size=kernel_size, output_size=output_size,
                             apply_layernorm=True, use_bf16=False)
    out = jax.block_until_ready(out)
    assert out.shape == (B, output_size, out_channels)
    assert jnp.allclose(out, ref, atol=1e-4, rtol=1e-4), "mismatch vs reference (f32 LN)"

    # f32 operands without LayerNorm.
    out_nln = conv_block_forward(x, w, b, gamma, beta,
                                 kernel_size=kernel_size, output_size=output_size,
                                 apply_layernorm=False, use_bf16=False)
    out_nln = jax.block_until_ready(out_nln)
    ref_nln = ref_forward(x, w, b, gamma, beta,
                          kernel_size=kernel_size, output_size=output_size,
                          apply_layernorm=False)
    assert jnp.allclose(out_nln, ref_nln, atol=1e-4, rtol=1e-4), "mismatch (no LN)"

    # Default path: bf16 matmul operands, f32 accumulation / LN — looser tolerance.
    out_bf16 = conv_block_forward(x, w, b, gamma, beta,
                                  kernel_size=kernel_size, output_size=output_size,
                                  apply_layernorm=True)
    out_bf16 = jax.block_until_ready(out_bf16)
    assert jnp.allclose(out_bf16, ref, atol=5e-2, rtol=5e-2), "mismatch (bf16)"

    # TODO(synk): when L % 8 != 0 the in-kernel (Bt, L, C_in) -> (Bt*L, C_in) collapse
    # incurs a Mosaic relayout copy; padding L to a sublane multiple while keeping exact
    # adaptive-pool windows is left as a follow-up.
    print("KERNEL_OK")
</pallas_src>

<mosaic_0001>
module attributes {stable_mosaic.version = 11 : i64} {
  func.func @conv_block_kernel(%arg0: i32, %arg1: memref<1x18x4xf32, #tpu.memory_space<vmem>>, %arg2: memref<3x4x128xf32, #tpu.memory_space<vmem>>, %arg3: memref<3x128xf32, #tpu.memory_space<vmem>>, %arg4: memref<1x4x128xf32, #tpu.memory_space<vmem>>) attributes {dimension_semantics = [#tpu.dimension_semantics<parallel>], iteration_bounds = array<i64: 2>, scalar_prefetch = 0 : i64, scratch_operands = 0 : i64, tpu.core_type = #tpu.core_type<tc>, window_params = [{transform_indices = @transform_0, window_bounds = array<i64: 1, 18, 4>}, {pipeline_mode = #tpu.pipeline_mode<synchronous>, transform_indices = @transform_1, window_bounds = array<i64: 3, 4, 128>}, {pipeline_mode = #tpu.pipeline_mode<synchronous>, transform_indices = @transform_2, window_bounds = array<i64: 3, 128>}, {transform_indices = @transform_3, window_bounds = array<i64: 1, 4, 128>}]} {
    %c0 = arith.constant 0 : index
    %c0_0 = arith.constant 0 : index
    %c0_1 = arith.constant 0 : index
    %0 = vector.load %arg1[%c0, %c0_0, %c0_1] : memref<1x18x4xf32, #tpu.memory_space<vmem>>, vector<1x18x4xf32>
    %1 = vector.extract_strided_slice %0 {offsets = [0, 0, 0], sizes = [1, 16, 4], strides = [1, 1, 1]} : vector<1x18x4xf32> to vector<1x16x4xf32>
    %2 = vector.shape_cast %1 : vector<1x16x4xf32> to vector<16x4xf32>
    %c0_2 = arith.constant 0 : index
    %c0_3 = arith.constant 0 : index
    %c0_4 = arith.constant 0 : index
    %3 = vector.load %arg2[%c0_2, %c0_3, %c0_4] : memref<3x4x128xf32, #tpu.memory_space<vmem>>, vector<1x4x128xf32>
    %4 = vector.shape_cast %3 : vector<1x4x128xf32> to vector<4x128xf32>
    %cst = arith.constant dense<0.000000e+00> : vector<16x128xf32>
    %5 = tpu.matmul %2, %4, %cst {dimension_numbers = #tpu.dot_dimension_numbers<[1], [0], [0], [1], [0, 0, 1, 1], [], []>} : vector<16x4xf32>, vector<4x128xf32>, vector<16x128xf32> -> vector<16x128xf32>
    %6 = vector.extract_strided_slice %0 {offsets = [0, 1, 0], sizes = [1, 16, 4], strides = [1, 1, 1]} : vector<1x18x4xf32> to vector<1x16x4xf32>
    %7 = vector.shape_cast %6 : vector<1x16x4xf32> to vector<16x4xf32>
    %c1 = arith.constant 1 : index
    %c0_5 = arith.constant 0 : index
    %c0_6 = arith.constant 0 : index
    %8 = vector.load %arg2[%c1, %c0_5, %c0_6] : memref<3x4x128xf32, #tpu.memory_space<vmem>>, vector<1x4x128xf32>
    %9 = vector.shape_cast %8 : vector<1x4x128xf32> to vector<4x128xf32>
    %cst_7 = arith.constant dense<0.000000e+00> : vector<16x128xf32>
    %10 = tpu.matmul %7, %9, %cst_7 {dimension_numbers = #tpu.dot_dimension_numbers<[1], [0], [0], [1], [0, 0, 1, 1], [], []>} : vector<16x4xf32>, vector<4x128xf32>, vector<16x128xf32> -> vector<16x128xf32>
    %11 = arith.addf %5, %10 : vector<16x128xf32>
    %12 = vector.extract_strided_slice %0 {offsets = [0, 2, 0], sizes = [1, 16, 4], strides = [1, 1, 1]} : vector<1x18x4xf32> to vector<1x16x4xf32>
    %13 = vector.shape_cast %12 : vector<1x16x4xf32> to vector<16x4xf32>
    %c2 = arith.constant 2 : index
    %c0_8 = arith.constant 0 : index
    %c0_9 = arith.constant 0 : index
    %14 = vector.load %arg2[%c2, %c0_8, %c0_9] : memref<3x4x128xf32, #tpu.memory_space<vmem>>, vector<1x4x128xf32>
    %15 = vector.shape_cast %14 : vector<1x4x128xf32> to vector<4x128xf32>
    %cst_10 = arith.constant dense<0.000000e+00> : vector<16x128xf32>
    %16 = tpu.matmul %13, %15, %cst_10 {dimension_numbers = #tpu.dot_dimension_numbers<[1], [0], [0], [1], [0, 0, 1, 1], [], []>} : vector<16x4xf32>, vector<4x128xf32>, vector<16x128xf32> -> vector<16x128xf32>
    %17 = arith.addf %11, %16 : vector<16x128xf32>
    %c0_11 = arith.constant 0 : index
    %c0_12 = arith.constant 0 : index
    %18 = vector.load %arg3[%c0_11, %c0_12] : memref<3x128xf32, #tpu.memory_space<vmem>>, vector<1x128xf32>
    %19 = vector.broadcast %18 : vector<1x128xf32> to vector<16x128xf32>
    %20 = arith.addf %17, %19 : vector<16x128xf32>
    %cst_13 = arith.constant dense<0.000000e+00> : vector<16xf32>
    %21 = vector.multi_reduction <add>, %20, %cst_13 [1] : vector<16x128xf32> to vector<16xf32>
    %22 = vector.shape_cast %21 : vector<16xf32> to vector<16x1xf32>
    %cst_14 = arith.constant 1.250000e-01 : f32
    %23 = vector.broadcast %cst_14 : f32 to vector<16x1xf32>
    %24 = arith.mulf %22, %23 : vector<16x1xf32>
    %25 = arith.mulf %20, %20 : vector<16x128xf32>
    %cst_15 = arith.constant dense<0.000000e+00> : vector<16xf32>
    %26 = vector.multi_reduction <add>, %25, %cst_15 [1] : vector<16x128xf32> to vector<16xf32>
    %27 = vector.shape_cast %26 : vector<16xf32> to vector<16x1xf32>
    %cst_16 = arith.constant 1.250000e-01 : f32
    %28 = vector.broadcast %cst_16 : f32 to vector<16x1xf32>
    %29 = arith.mulf %27, %28 : vector<16x1xf32>
    %30 = arith.mulf %24, %24 : vector<16x1xf32>
    %31 = arith.subf %29, %30 : vector<16x1xf32>
    %32 = vector.broadcast %24 : vector<16x1xf32> to vector<16x128xf32>
    %33 = arith.subf %20, %32 : vector<16x128xf32>
    %cst_17 = arith.constant 9.99999974E-6 : f32
    %34 = vector.broadcast %cst_17 : f32 to vector<16x1xf32>
    %35 = arith.addf %31, %34 : vector<16x1xf32>
    %36 = math.rsqrt %35 : vector<16x1xf32>
    %37 = vector.broadcast %36 : vector<16x1xf32> to vector<16x128xf32>
    %38 = arith.mulf %33, %37 : vector<16x128xf32>
    %c1_18 = arith.constant 1 : index
    %c0_19 = arith.constant 0 : index
    %39 = vector.load %arg3[%c1_18, %c0_19] : memref<3x128xf32, #tpu.memory_space<vmem>>, vector<1x128xf32>
    %40 = vector.broadcast %39 : vector<1x128xf32> to vector<16x128xf32>
    %41 = arith.mulf %38, %40 : vector<16x128xf32>
    %c2_20 = arith.constant 2 : index
    %c0_21 = arith.constant 0 : index
    %42 = vector.load %arg3[%c2_20, %c0_21] : memref<3x128xf32, #tpu.memory_space<vmem>>, vector<1x128xf32>
    %43 = vector.broadcast %42 : vector<1x128xf32> to vector<16x128xf32>
    %44 = arith.addf %41, %43 : vector<16x128xf32>
    %cst_22 = arith.constant 0.000000e+00 : f32
    %45 = vector.broadcast %cst_22 : f32 to vector<16x128xf32>
    %46 = arith.maximumf %44, %45 : vector<16x128xf32>
    %47 = vector.shape_cast %46 : vector<16x128xf32> to vector<1x16x128xf32>
    %48 = vector.shape_cast %47 : vector<1x16x128xf32> to vector<1x4x4x128xf32>
    %cst_23 = arith.constant dense<0xFF800000> : vector<1x4x128xf32>
    %49 = vector.multi_reduction <maximumf>, %48, %cst_23 [2] : vector<1x4x4x128xf32> to vector<1x4x128xf32>
    %c0_24 = arith.constant 0 : index
    %c0_25 = arith.constant 0 : index
    %c0_26 = arith.constant 0 : index
    %50 = vector.load %arg4[%c0_24, %c0_25, %c0_26] : memref<1x4x128xf32, #tpu.memory_space<vmem>>, vector<1x4x128xf32>
    tpu.vector_store %arg4[%c0_24, %c0_25, %c0_26], %49 {strides = array<i32>} : memref<1x4x128xf32, #tpu.memory_space<vmem>>, vector<1x4x128xf32>,
    return
  }
  func.func @transform_0(%arg0: i32) -> (i32, i32, i32) {
    %c0_i32 = arith.constant 0 : i32
    %c0_i32_0 = arith.constant 0 : i32
    %c0_i32_1 = arith.constant 0 : i32
    return %arg0, %c0_i32, %c0_i32_0 : i32, i32, i32
  }
  func.func @transform_1(%arg0: i32) -> (i32, i32, i32) {
    %c0_i32 = arith.constant 0 : i32
    %c0_i32_0 = arith.constant 0 : i32
    %c0_i32_1 = arith.constant 0 : i32
    %c0_i32_2 = arith.constant 0 : i32
    return %c0_i32, %c0_i32_0, %c0_i32_1 : i32, i32, i32
  }
  func.func @transform_2(%arg0: i32) -> (i32, i32) {
    %c0_i32 = arith.constant 0 : i32
    %c0_i32_0 = arith.constant 0 : i32
    %c0_i32_1 = arith.constant 0 : i32
    return %c0_i32, %c0_i32_0 : i32, i32
  }
  func.func @transform_3(%arg0: i32) -> (i32, i32, i32) {
    %c0_i32 = arith.constant 0 : i32
    %c0_i32_0 = arith.constant 0 : i32
    %c0_i32_1 = arith.constant 0 : i32
    return %arg0, %c0_i32, %c0_i32_0 : i32, i32, i32
  }
}

</mosaic_0001>

<llo_original>
// kernel: tpu_custom_call.1
$region0: #{tpu_custom_call.1}
  #allocation0 [shape = 'u32[]', space=smem, size = 0x4, offset = 0x4, fixed_abs, tag = 'smem constant byte address 0x4 - core index']
  #allocation1 [shape = 'u32[144,128]{1,0:T(1,128)}', space=vmem, size = 0x12000, scoped, tag = 'internal scratch']
  %s0 = inlined_call_operand.vmem [shape: f32[2,18,4], index: 0, kind: input, shape index: {}]
  %s1 = inlined_call_operand.vmem [shape: f32[3,4,128], index: 1, kind: input, shape index: {}]
  %s2 = inlined_call_operand.vmem [shape: f32[3,128], index: 2, kind: input, shape index: {}]
  %s3 = inlined_call_operand.hbm [shape: f32[2,4,128], index: 3, kind: output, shape index: {}]
  %s4 = sld [smem:[#allocation0]]
  $region45: #{tpu_custom_call.1} parent=0
    _
  %s6 = ssub.s32 1, %s4
  %s7 = scalar_select 0, %s6, %s4
  $region1: #{tpu_custom_call.1} parent=0
    #allocation2 [shape = 'u8[4096]{0}', space=vmem, size = 0x1000, scoped, tag = 'output window, operand 0']
    #allocation3 [shape = 's32[2]{0}', space=sflag, size = 0x8, scoped, tag = 'scoped memory for tpu_custom_call.1']
    %8 = vsyncpa [#allocation3], 0
    %s9 = scalar_lea.sflag [#allocation3], 1
    %10 = vsyncpa %s9, 0
    loop: start=0, step=1, limit=4
    $region2: #{tpu_custom_call.1} parent=1 // loop_pre_header
      _
    $region3: #{tpu_custom_call.1} parent=1 // loop_header
      %s12 = sphi 0, %s16
      %p13 = scmp.ge.s32.totalorder %s12, 4
      %s22 = sphi 0, %s24
      %s25 = sphi 0, %s22
      %s26 = sphi 0, %s25
      %s42 = sphi 0, %s26
      %s46 = sphi 0, %s46
      %s48 = sphi 0, %s46
      %s49 = sphi 0, %s48
      %s63 = sphi 0, %s49
      %s67 = sphi 0, %s67
      %s69 = sphi 0, %s67
      %s70 = sphi 0, %s69
      %s84 = sphi 0, %s70
      %s90 = sphi 0, %s92
      %s93 = sphi 0, %s90
      %s94 = sphi 0, %s93
      %s110 = sphi 0, %s94
    $region4: #{tpu_custom_call.1} parent=1 // loop_header_branch
      %15 = sbr.rel (%p13) target = $region8
    $region5: #{tpu_custom_call.1} parent=1 // loop_body
      %s17 = ssub.s32 %s12, 1
      %s18 = ssub.s32 %s12, 2
      %s19 = sadd.s32 %s12, 1
      %s20 = ssub.s32 %s12, %s19
      %p21 = scmp.eq.s32.totalorder %s20, 0
      %s23 = sadd.s32 %s22, 1
      %s24 = scalar_select %p21, %s22, %s23
      %p27 = pneg %p21
      %p28 = scmp.eq.s32.totalorder %s12, 1
      %p29 = por %p27, %p28
      %p30 = scmp.ne.s32.totalorder %s22, %s25
      %p31 = scmp.eq.s32.totalorder %s12, 0
      %p32 = por %p30, %p31
      %p33 = scmp.ne.s32.totalorder %s22, %s25
      %p34 = scmp.eq.s32.totalorder %s17, 1
      %p35 = por %p33, %p34
      %p36 = scmp.ne.s32.totalorder %s25, %s26
      %p37 = scmp.eq.s32.totalorder %s17, 0
      %p38 = por %p36, %p37
      %p39 = scmp.ne.s32.totalorder %s25, %s26
      %p40 = scmp.eq.s32.totalorder %s18, 1
      %p41 = por %p39, %p40
      %p43 = scmp.ne.s32.totalorder %s26, %s42
      %p44 = scmp.eq.s32.totalorder %s18, 0
      %p45 = por %p43, %p44
      %s47 = sadd.s32 %s46, 1
      %p50 = scmp.eq.s32.totalorder %s12, 1
      %p51 = scmp.ne.s32.totalorder %s46, %s48
      %p52 = scmp.eq.s32.totalorder %s12, 0
      %p53 = por %p51, %p52
      %p54 = scmp.ne.s32.totalorder %s46, %s48
      %p55 = scmp.eq.s32.totalorder %s17, 1
      %p56 = por %p54, %p55
      %p57 = scmp.ne.s32.totalorder %s48, %s49
      %p58 = scmp.eq.s32.totalorder %s17, 0
      %p59 = por %p57, %p58
      %p60 = scmp.ne.s32.totalorder %s48, %s49
      %p61 = scmp.eq.s32.totalorder %s18, 1
      %p62 = por %p60, %p61
      %p64 = scmp.ne.s32.totalorder %s49, %s63
      %p65 = scmp.eq.s32.totalorder %s18, 0
      %p66 = por %p64, %p65
      %s68 = sadd.s32 %s67, 1
      %p71 = scmp.eq.s32.totalorder %s12, 1
      %p72 = scmp.ne.s32.totalorder %s67, %s69
      %p73 = scmp.eq.s32.totalorder %s12, 0
      %p74 = por %p72, %p73
      %p75 = scmp.ne.s32.totalorder %s67, %s69
      %p76 = scmp.eq.s32.totalorder %s17, 1
      %p77 = por %p75, %p76
      %p78 = scmp.ne.s32.totalorder %s69, %s70
      %p79 = scmp.eq.s32.totalorder %s17, 0
      %p80 = por %p78, %p79
      %p81 = scmp.ne.s32.totalorder %s69, %s70
      %p82 = scmp.eq.s32.totalorder %s18, 1
      %p83 = por %p81, %p82
      %p85 = scmp.ne.s32.totalorder %s70, %s84
      %p86 = scmp.eq.s32.totalorder %s18, 0
      %p87 = por %p85, %p86
      %s88 = ssub.s32 %s12, %s19
      %p89 = scmp.eq.s32.totalorder %s88, 0
      %s91 = sadd.s32 %s90, 1
      %s92 = scalar_select %p89, %s90, %s91
      %p95 = pneg %p89
      %p96 = scmp.eq.s32.totalorder %s12, 1
      %p97 = por %p95, %p96
      %p98 = scmp.ne.s32.totalorder %s90, %s93
      %p99 = scmp.eq.s32.totalorder %s12, 0
      %p100 = por %p98, %p99
      %p101 = scmp.ne.s32.totalorder %s90, %s93
      %p102 = scmp.eq.s32.totalorder %s17, 1
      %p103 = por %p101, %p102
      %p104 = scmp.ne.s32.totalorder %s93, %s94
      %p105 = scmp.eq.s32.totalorder %s17, 0
      %p106 = por %p104, %p105
      %p107 = scmp.ne.s32.totalorder %s93, %s94
      %p108 = scmp.eq.s32.totalorder %s18, 1
      %p109 = por %p107, %p108
      %p111 = scmp.ne.s32.totalorder %s94, %s110
      %p112 = scmp.eq.s32.totalorder %s18, 0
      %p113 = por %p111, %p112
      %p114 = scmp.le.s32.totalorder 1, %s12
      %p115 = scmp.lt.s32.totalorder %s12, 3
      %p116 = pnand %p114, %p115
      %p117 = pneg %p116
      // Predicated region
      $region9: #{tpu_custom_call.1} parent=5 // pred_check
        _
      $region10: #{tpu_custom_call.1} parent=5 // pred_check_branch
        %119 = sbr.rel (%p116) target = $region12
      $region11: #{tpu_custom_call.1} parent=5 // pred_region
        %s120 = ssub.s32 %s12, 1
        // Predicated region
        $region13: #{tpu_custom_call.1} parent=11 // pred_check
          %p121 = pneg %p59
        $region14: #{tpu_custom_call.1} parent=11 // pred_check_branch
          %123 = sbr.rel (%p121) target = $region16
        $region15: #{tpu_custom_call.1} parent=11 // pred_region
          _
        $region16: #{tpu_custom_call.1} parent=11 // pred_fallthru
          _
        // Predicated region
        $region17: #{tpu_custom_call.1} parent=11 // pred_check
          %p124 = pneg %p80
        $region18: #{tpu_custom_call.1} parent=11 // pred_check_branch
          %126 = sbr.rel (%p124) target = $region20
        $region19: #{tpu_custom_call.1} parent=11 // pred_region
          _
        $region20: #{tpu_custom_call.1} parent=11 // pred_fallthru
          _
      $region12: #{tpu_custom_call.1} parent=5 // pred_fallthru
        _
      %p127 = scmp.lt.s32.totalorder %s12, 2
      // Predicated region
      $region21: #{tpu_custom_call.1} parent=5 // pred_check
        %p128 = pneg %p127
      $region22: #{tpu_custom_call.1} parent=5 // pred_check_branch
        %130 = sbr.rel (%p128) target = $region24
      $region23: #{tpu_custom_call.1} parent=5 // pred_region
        // Predicated region
        $region25: #{tpu_custom_call.1} parent=23 // pred_check
          %p131 = pneg %p32
        $region26: #{tpu_custom_call.1} parent=23 // pred_check_branch
          %133 = sbr.rel (%p131) target = $region28
        $region27: #{tpu_custom_call.1} parent=23 // pred_region
          %p134 = scmp.lt.s32.totalorder %s12, 1
          %s135 = scalar_select %p134, %s12, 1
          %s136 = smul.addr %s135, 3
          %s137 = smul.addr %s136, 8
          %s138 = scalar_lea.vmem %s0, %s137
        $region28: #{tpu_custom_call.1} parent=23 // pred_fallthru
          _
      $region24: #{tpu_custom_call.1} parent=5 // pred_fallthru
        _
      %p139 = scmp.le.s32.totalorder 1, %s12
      %p140 = scmp.lt.s32.totalorder %s12, 3
      %p141 = pnand %p139, %p140
      %p142 = pneg %p141
      // Predicated region
      $region29: #{tpu_custom_call.1} parent=5 // pred_check
        _
      $region30: #{tpu_custom_call.1} parent=5 // pred_check_branch
        %144 = sbr.rel (%p141) target = $region32
      $region31: #{tpu_custom_call.1} parent=5 // pred_region
        %s145 = ssub.s32 %s12, 1
        %p146 = scmp.lt.s32.totalorder %s17, 1
        %s147 = scalar_select %p146, %s17, 1
        %s148 = smul.addr %s147, 3
        %s149 = smul.addr %s148, 8
        %s150 = scalar_lea.vmem %s0, %s149
        %p151 = pneg %p38
        %p152 = pneg %p35
        %p153 = pneg %p59
        %p154 = pneg %p56
        %p155 = pneg %p80
        %p156 = pneg %p77
        %p157 = pneg %p106
        %p158 = pneg %p103
        %s159 = sand.u32 %s93, 1
        %s160 = scalar_lea.sflag [#allocation3], %s159
        %s161 = sand.u32 %s93, 1
        %s162 = smul.addr %s161, 4
        %s163 = scalar_lea.vmem [#allocation2], %s162
        %p164 = scmp.lt.s32.totalorder %s17, 1
        %s165 = scalar_select %p164, %s17, 1
        %s166 = smul.addr %s165, 3
        %s167 = smul.addr %s166, 8
        %s168 = scalar_lea.vmem %s0, %s167
        %v169 = vld [vmem:[%s168] sm:$0xff]
        %v170 = vld [vmem:[%s168 + $0x8] sm:$0xff]
        %v171 = vld [vmem:[%s168 + $0x10] sm:$0x3]
        %v172 = vld [vmem:[%s1] sm:$0xf]
        %s173 = scalar_lea.vmem %s1, 4
        %v174 = vld [vmem:[%s173] sm:$0xf]
        %vm178 = vcmask 1046528
        %v179 = vrot.slane %v169, 1
        %v180 = vrot.slane %v170, 1
        %v181 = vsel %vm178, %v179, %v180
        %v182 = vrot.slane %v171, 1
        %v183 = vsel %vm178, %v180, %v182
        %vm184 = vcmask 31744
        %v185 = vsel %vm184, %v181, 0
        %v187 = vsel %vm184, %v183, 0
        %vm189 = vcmask 1043456
        %v191 = vsel %vm189, %v174, 0
        %193 = vmatprep.subr.mxu0 0.0
        %194 = vmatpush1.msra.mxu0 %v191
        %195 = vmatprep.subr.mxu0 0.0
        %196 = vmatpush1.msra.mxu0 0.0
        %197 = vmatprep.subr.mxu0 0.0
        %198 = vmatpush1.msra.mxu0 0.0
        %199 = vmatprep.subr.mxu0 0.0
        %200 = vmatpush1.msra.mxu0 0.0
        %201 = vmatprep.subr.mxu0 0.0
        %202 = vmatpush1.msra.mxu0 0.0
        %203 = vmatprep.subr.mxu0 0.0
        %204 = vmatpush1.msra.mxu0 0.0
        %205 = vmatprep.subr.mxu0 0.0
        %206 = vmatpush1.msra.mxu0 0.0
        %207 = vmatprep.subr.mxu0 0.0
        %208 = vmatpush1.msra.mxu0 0.0
        %209 = vmatprep.subr.mxu0 0.0
        %210 = vmatpush1.msra.mxu0 0.0
        %211 = vmatprep.subr.mxu0 0.0
        %212 = vmatpush1.msra.mxu0 0.0
        %213 = vmatprep.subr.mxu0 0.0
        %214 = vmatpush1.msra.mxu0 0.0
        %215 = vmatprep.subr.mxu0 0.0
        %216 = vmatpush1.msra.mxu0 0.0
        %217 = vmatprep.subr.mxu0 0.0
        %218 = vmatpush1.msra.mxu0 0.0
        %219 = vmatprep.subr.mxu0 0.0
        %220 = vmatpush1.msra.mxu0 0.0
        %221 = vmatprep.subr.mxu0 0.0
        %222 = vmatpush1.msra.mxu0 0.0
        %223 = vmatprep.subr.mxu0 0.0
        %224 = vmatpush1.msra.mxu0 0.0
        %225 = vmatprep.subr.mxu0 0.0
        %226 = vmatpush1.msra.mxu0 0.0
        %227 = vmatprep.subr.mxu0 0.0
        %228 = vmatpush1.msra.mxu0 0.0
        %229 = vmatprep.subr.mxu0 0.0
        %230 = vmatpush1.msra.mxu0 0.0
        %231 = vmatprep.subr.mxu0 0.0
        %232 = vmatpush1.msra.mxu0 0.0
        %233 = vmatprep.subr.mxu0 0.0
        %234 = vmatpush1.msra.mxu0 0.0
        %235 = vmatprep.subr.mxu0 0.0
        %236 = vmatpush1.msra.mxu0 0.0
        %237 = vmatprep.subr.mxu0 0.0
        %238 = vmatpush1.msra.mxu0 0.0
        %239 = vmatprep.subr.mxu0 0.0
        %240 = vmatpush1.msra.mxu0 0.0
        %241 = vmatprep.subr.mxu0 0.0
        %242 = vmatpush1.msra.mxu0 0.0
        %243 = vmatprep.subr.mxu0 0.0
        %244 = vmatpush1.msra.mxu0 0.0
        %245 = vmatprep.subr.mxu0 0.0
        %246 = vmatpush1.msra.mxu0 0.0
        %247 = vmatprep.subr.mxu0 0.0
        %248 = vmatpush1.msra.mxu0 0.0
        %249 = vmatprep.subr.mxu0 0.0
        %250 = vmatpush1.msra.mxu0 0.0
        %251 = vmatprep.subr.mxu0 0.0
        %252 = vmatpush1.msra.mxu0 0.0
        %253 = vmatprep.subr.mxu0 0.0
        %254 = vmatpush1.msra.mxu0 0.0
        %255 = vmatprep.subr.mxu0 0.0
        %256 = vmatpush1.msra.mxu0 0.0
        %257 = vmatprep.mubr.f32.mxu0 0.0
        %258 = vmatmul.mubr.f32.gmra.mrb[0].mxu0 %v185
        %v259 = vpop.f32.mrb[0].mxu0
        %v260 = vadd.f32 0.0, %v259
        %v261 = vpop.f32.mrb[0].mxu0
        %262 = vmatprep.mubr.f32.mxu0 0.0
        %263 = vmatmul.mubr.f32.gmra.mrb[0].mxu0 %v187
        %v264 = vpop.f32.mrb[0].mxu0
        %v265 = vadd.f32 0.0, %v264
        %v266 = vpop.f32.mrb[0].mxu0
        %267 = vdwg.mxu0
        %v268 = vsel %vm184, %v169, 0
        %v270 = vsel %vm184, %v170, 0
        %v273 = vsel %vm189, %v172, 0
        %275 = vmatprep.subr.mxu0 0.0
        %276 = vmatpush1.msra.mxu0 %v273
        %277 = vmatprep.subr.mxu0 0.0
        %278 = vmatpush1.msra.mxu0 0.0
        %279 = vmatprep.subr.mxu0 0.0
        %280 = vmatpush1.msra.mxu0 0.0
        %281 = vmatprep.subr.mxu0 0.0
        %282 = vmatpush1.msra.mxu0 0.0
        %283 = vmatprep.subr.mxu0 0.0
        %284 = vmatpush1.msra.mxu0 0.0
        %285 = vmatprep.subr.mxu0 0.0
        %286 = vmatpush1.msra.mxu0 0.0
        %287 = vmatprep.subr.mxu0 0.0
        %288 = vmatpush1.msra.mxu0 0.0
        %289 = vmatprep.subr.mxu0 0.0
        %290 = vmatpush1.msra.mxu0 0.0
        %291 = vmatprep.subr.mxu0 0.0
        %292 = vmatpush1.msra.mxu0 0.0
        %293 = vmatprep.subr.mxu0 0.0
        %294 = vmatpush1.msra.mxu0 0.0
        %295 = vmatprep.subr.mxu0 0.0
        %296 = vmatpush1.msra.mxu0 0.0
        %297 = vmatprep.subr.mxu0 0.0
        %298 = vmatpush1.msra.mxu0 0.0
        %299 = vmatprep.subr.mxu0 0.0
        %300 = vmatpush1.msra.mxu0 0.0
        %301 = vmatprep.subr.mxu0 0.0
        %302 = vmatpush1.msra.mxu0 0.0
        %303 = vmatprep.subr.mxu0 0.0
        %304 = vmatpush1.msra.mxu0 0.0
        %305 = vmatprep.subr.mxu0 0.0
        %306 = vmatpush1.msra.mxu0 0.0
        %307 = vmatprep.subr.mxu0 0.0
        %308 = vmatpush1.msra.mxu0 0.0
        %309 = vmatprep.subr.mxu0 0.0
        %310 = vmatpush1.msra.mxu0 0.0
        %311 = vmatprep.subr.mxu0 0.0
        %312 = vmatpush1.msra.mxu0 0.0
        %313 = vmatprep.subr.mxu0 0.0
        %314 = vmatpush1.msra.mxu0 0.0
        %315 = vmatprep.subr.mxu0 0.0
        %316 = vmatpush1.msra.mxu0 0.0
        %317 = vmatprep.subr.mxu0 0.0
        %318 = vmatpush1.msra.mxu0 0.0
        %319 = vmatprep.subr.mxu0 0.0
        %320 = vmatpush1.msra.mxu0 0.0
        %321 = vmatprep.subr.mxu0 0.0
        %322 = vmatpush1.msra.mxu0 0.0
        %323 = vmatprep.subr.mxu0 0.0
        %324 = vmatpush1.msra.mxu0 0.0
        %325 = vmatprep.subr.mxu0 0.0
        %326 = vmatpush1.msra.mxu0 0.0
        %327 = vmatprep.subr.mxu0 0.0
        %328 = vmatpush1.msra.mxu0 0.0
        %329 = vmatprep.subr.mxu0 0.0
        %330 = vmatpush1.msra.mxu0 0.0
        %331 = vmatprep.subr.mxu0 0.0
        %332 = vmatpush1.msra.mxu0 0.0
        %333 = vmatprep.subr.mxu0 0.0
        %334 = vmatpush1.msra.mxu0 0.0
        %335 = vmatprep.subr.mxu0 0.0
        %336 = vmatpush1.msra.mxu0 0.0
        %337 = vmatprep.subr.mxu0 0.0
        %338 = vmatpush1.msra.mxu0 0.0
        %339 = vmatprep.mubr.f32.mxu0 0.0
        %340 = vmatmul.mubr.f32.gmra.mrb[0].mxu0 %v268
        %v341 = vpop.f32.mrb[0].mxu0
        %v342 = vadd.f32 %v260, %v341
        %v343 = vpop.f32.mrb[0].mxu0
        %344 = vmatprep.mubr.f32.mxu0 0.0
        %345 = vmatmul.mubr.f32.gmra.mrb[0].mxu0 %v270
        %v346 = vpop.f32.mrb[0].mxu0
        %v347 = vadd.f32 %v265, %v346
        %v348 = vpop.f32.mrb[0].mxu0
        %349 = vdwg.mxu0
        %s350 = scalar_lea.vmem %s1, 8
        %v351 = vld [vmem:[%s350] sm:$0xf]
        %vm352 = vcmask 1045504
        %v353 = vrot.slane %v169, 2
        %v354 = vrot.slane %v170, 2
        %v355 = vsel %vm352, %v353, %v354
        %v356 = vrot.slane %v171, 2
        %v357 = vsel %vm352, %v354, %v356
        %v358 = vsel %vm184, %v355, 0
        %v360 = vsel %vm184, %v357, 0
        %v363 = vsel %vm189, %v351, 0
        %365 = vmatprep.subr.mxu0 0.0
        %366 = vmatpush1.msra.mxu0 %v363
        %367 = vmatprep.subr.mxu0 0.0
        %368 = vmatpush1.msra.mxu0 0.0
        %369 = vmatprep.subr.mxu0 0.0
        %370 = vmatpush1.msra.mxu0 0.0
        %371 = vmatprep.subr.mxu0 0.0
        %372 = vmatpush1.msra.mxu0 0.0
        %373 = vmatprep.subr.mxu0 0.0
        %374 = vmatpush1.msra.mxu0 0.0
        %375 = vmatprep.subr.mxu0 0.0
        %376 = vmatpush1.msra.mxu0 0.0
        %377 = vmatprep.subr.mxu0 0.0
        %378 = vmatpush1.msra.mxu0 0.0
        %379 = vmatprep.subr.mxu0 0.0
        %380 = vmatpush1.msra.mxu0 0.0
        %381 = vmatprep.subr.mxu0 0.0
        %382 = vmatpush1.msra.mxu0 0.0
        %383 = vmatprep.subr.mxu0 0.0
        %384 = vmatpush1.msra.mxu0 0.0
        %385 = vmatprep.subr.mxu0 0.0
        %386 = vmatpush1.msra.mxu0 0.0
        %387 = vmatprep.subr.mxu0 0.0
        %388 = vmatpush1.msra.mxu0 0.0
        %389 = vmatprep.subr.mxu0 0.0
        %390 = vmatpush1.msra.mxu0 0.0
        %391 = vmatprep.subr.mxu0 0.0
        %392 = vmatpush1.msra.mxu0 0.0
        %393 = vmatprep.subr.mxu0 0.0
        %394 = vmatpush1.msra.mxu0 0.0
        %395 = vmatprep.subr.mxu0 0.0
        %396 = vmatpush1.msra.mxu0 0.0
        %397 = vmatprep.subr.mxu0 0.0
        %398 = vmatpush1.msra.mxu0 0.0
        %399 = vmatprep.subr.mxu0 0.0
        %400 = vmatpush1.msra.mxu0 0.0
        %401 = vmatprep.subr.mxu0 0.0
        %402 = vmatpush1.msra.mxu0 0.0
        %403 = vmatprep.subr.mxu0 0.0
        %404 = vmatpush1.msra.mxu0 0.0
        %405 = vmatprep.subr.mxu0 0.0
        %406 = vmatpush1.msra.mxu0 0.0
        %407 = vmatprep.subr.mxu0 0.0
        %408 = vmatpush1.msra.mxu0 0.0
        %409 = vmatprep.subr.mxu0 0.0
        %410 = vmatpush1.msra.mxu0 0.0
        %411 = vmatprep.subr.mxu0 0.0
        %412 = vmatpush1.msra.mxu0 0.0
        %413 = vmatprep.subr.mxu0 0.0
        %414 = vmatpush1.msra.mxu0 0.0
        %415 = vmatprep.subr.mxu0 0.0
        %416 = vmatpush1.msra.mxu0 0.0
        %417 = vmatprep.subr.mxu0 0.0
        %418 = vmatpush1.msra.mxu0 0.0
        %419 = vmatprep.subr.mxu0 0.0
        %420 = vmatpush1.msra.mxu0 0.0
        %421 = vmatprep.subr.mxu0 0.0
        %422 = vmatpush1.msra.mxu0 0.0
        %423 = vmatprep.subr.mxu0 0.0
        %424 = vmatpush1.msra.mxu0 0.0
        %425 = vmatprep.subr.mxu0 0.0
        %426 = vmatpush1.msra.mxu0 0.0
        %427 = vmatprep.subr.mxu0 0.0
        %428 = vmatpush1.msra.mxu0 0.0
        %429 = vmatprep.mubr.f32.mxu0 0.0
        %430 = vmatmul.mubr.f32.gmra.mrb[0].mxu0 %v358
        %v431 = vpop.f32.mrb[0].mxu0
        %v432 = vadd.f32 0.0, %v431
        %v433 = vpop.f32.mrb[0].mxu0
        %434 = vmatprep.mubr.f32.mxu0 0.0
        %435 = vmatmul.mubr.f32.gmra.mrb[0].mxu0 %v360
        %v436 = vpop.f32.mrb[0].mxu0
        %v437 = vadd.f32 0.0, %v436
        %v438 = vpop.f32.mrb[0].mxu0
        %439 = vdwg.mxu0
        %v440 = vadd.f32 %v342, %v432
        %v441 = vadd.f32 %v347, %v437
        %v442 = vld [vmem:[%s2] sm:$0x1]
        %v443 = vlaneseq
        %v444 = vshrl.u32 %v443, 7
        %v445 = vsub.s32 0, %v444
        %v446 = vrot.slane %v442, %v445
        %v447 = vadd.f32 %v440, %v446
        %v448 = vadd.f32 %v441, %v446
        %449 = vadd.xlane.f32.xlu0 %v447
        %v450 = vpop.xlane.xlu0 %449
        %451 = vadd.xlane.f32.xlu0 %v448
        %v452 = vpop.xlane.xlu0 %451
        %v453 = vmul.f32 %v450, 0.125
        %v454 = vmul.f32 %v452, 0.125
        %v455 = vmul.f32 %v447, %v447
        %v456 = vmul.f32 %v448, %v448
        %457 = vadd.xlane.f32.xlu0 %v455
        %v458 = vpop.xlane.xlu0 %457
        %459 = vadd.xlane.f32.xlu0 %v456
        %v460 = vpop.xlane.xlu0 %459
        %v461 = vmul.f32 %v458, 0.125
        %v462 = vmul.f32 %v460, 0.125
        %v463 = vmul.f32 %v453, %v453
        %v464 = vmul.f32 %v454, %v454
        %v465 = vsub.f32 %v461, %v463
        %v466 = vsub.f32 %v462, %v464
        %v467 = vsub.f32 %v447, %v453
        %v468 = vsub.f32 %v448, %v454
        %v469 = vadd.f32 %v465, 1e-05
        %v470 = vadd.f32 %v466, 1e-05
        %v471 = vrsqrt.pop %v469
        %v472 = vrsqrt.pop %v470
        %v473 = vmul.f32 %v467, %v471
        %v474 = vmul.f32 %v468, %v472
        %v475 = vld [vmem:[%s2 + $0x1] sm:$0x1]
        %v476 = vlaneseq
        %v477 = vshrl.u32 %v476, 7
        %v478 = vsub.s32 0, %v477
        %v479 = vrot.slane %v475, %v478
        %v480 = vmul.f32 %v473, %v479
        %v481 = vmul.f32 %v474, %v479
        %v482 = vld [vmem:[%s2 + $0x2] sm:$0x1]
        %v483 = vlaneseq
        %v484 = vshrl.u32 %v483, 7
        %v485 = vsub.s32 0, %v484
        %v486 = vrot.slane %v482, %v485
        %v487 = vadd.f32 %v480, %v486
        %v488 = vadd.f32 %v481, %v486
        %v489 = vmax.f32 %v487, 0.0
        %v490 = vmax.f32 %v488, 0.0
        %v493 = vcombine.high %v489, %v489
        %v494 = vcombine.high %v490, %v490
        %v497 = vsel %vm189, %v489, -inf
        %v498 = vrot.slane %v497, 4
        %v499 = vmax.f32 %v497, %v498
        %v500 = vrot.slane %v499, 2
        %v501 = vmax.f32 %v499, %v500
        %v502 = vrot.slane %v501, 1
        %v503 = vmax.f32 %v501, %v502
        %v504 = vsel %vm189, %v493, -inf
        %v505 = vrot.slane %v504, 4
        %v506 = vmax.f32 %v504, %v505
        %v507 = vrot.slane %v506, 2
        %v508 = vmax.f32 %v506, %v507
        %v509 = vrot.slane %v508, 1
        %v510 = vmax.f32 %v508, %v509
        %v511 = vsel %vm189, %v490, -inf
        %v512 = vrot.slane %v511, 4
        %v513 = vmax.f32 %v511, %v512
        %v514 = vrot.slane %v513, 2
        %v515 = vmax.f32 %v513, %v514
        %v516 = vrot.slane %v515, 1
        %v517 = vmax.f32 %v515, %v516
        %v518 = vsel %vm189, %v494, -inf
        %v519 = vrot.slane %v518, 4
        %v520 = vmax.f32 %v518, %v519
        %v521 = vrot.slane %v520, 2
        %v522 = vmax.f32 %v520, %v521
        %v523 = vrot.slane %v522, 1
        %v524 = vmax.f32 %v522, %v523
        %vm529 = vcmask 1041409
        %v530 = vsel %vm529, %v510, %v503
        %vm531 = vcmask 1042434
        %v532 = vsel %vm531, %v517, %v530
        %vm533 = vcmask 1043459
        %v534 = vsel %vm533, %v524, %v532
        %536 = vst [vmem:[%s163] sm:$0xf] %v534
        %s537 = sand.u32 %s93, 1
        %s538 = scalar_lea.sflag [#allocation3], %s537
        %s539 = sand.u32 %s93, 1
        %s540 = smul.addr %s539, 4
        %s541 = scalar_lea.vmem [#allocation2], %s540
        // Predicated region
        $region33: #{tpu_custom_call.1} parent=31 // pred_check
          %p542 = pneg %p103
        $region34: #{tpu_custom_call.1} parent=31 // pred_check_branch
          %544 = sbr.rel (%p542) target = $region36
        $region35: #{tpu_custom_call.1} parent=31 // pred_region
          %s546 = ssub.s32 64, 64
          %547 = vsyncadd %s538, %s546
          %s548 = smul.addr %s17, 64
          %s549 = scalar_lea.hbm %s3, %s548
          %s551 = sshll.u32 %s541, 4
          %s552 = int_to_ptr.vmem [resolvable:$true] %s551
          %554 = dma.vmem_to_hbm [thread:$0]  %s552, 64, %s549, %s538
        $region36: #{tpu_custom_call.1} parent=31 // pred_fallthru
          _
      $region32: #{tpu_custom_call.1} parent=5 // pred_fallthru
        _
      %p555 = scmp.le.s32.totalorder 2, %s12
      // Predicated region
      $region37: #{tpu_custom_call.1} parent=5 // pred_check
        %p556 = pneg %p555
      $region38: #{tpu_custom_call.1} parent=5 // pred_check_branch
        %558 = sbr.rel (%p556) target = $region40
      $region39: #{tpu_custom_call.1} parent=5 // pred_region
        %s559 = ssub.s32 %s12, 2
        // Predicated region
        $region41: #{tpu_custom_call.1} parent=39 // pred_check
          %p560 = pneg %p109
        $region42: #{tpu_custom_call.1} parent=39 // pred_check_branch
          %562 = sbr.rel (%p560) target = $region44
        $region43: #{tpu_custom_call.1} parent=39 // pred_region
          %s563 = sand.u32 %s94, 1
          %s564 = scalar_lea.sflag [#allocation3], %s563
          %s565 = sand.u32 %s94, 1
          %s566 = smul.addr %s565, 4
          %s567 = scalar_lea.vmem [#allocation2], %s566
          %568 = dma.done %s564, 64
        $region44: #{tpu_custom_call.1} parent=39 // pred_fallthru
          _
      $region40: #{tpu_custom_call.1} parent=5 // pred_fallthru
        _
    $region6: #{tpu_custom_call.1} parent=1 // loop_footer
      %s16 = sadd.s32 1, %s12
    $region7: #{tpu_custom_call.1} parent=1 // loop_footer_branch
      %11 = sbr.rel target = $region3
    $region8: #{tpu_custom_call.1} parent=1 // loop_exit
      _
    %569 = vsyncpa [#allocation3], 1
    %s570 = scalar_lea.sflag [#allocation3], 1
    %571 = vsyncpa %s570, 1

</llo_original>
